<compile_context>
chip_gen: v7x
topology: tpu7x:2x2x1
jax: 0.10.0
libtpu: 0.0.40
codegen_flags: <defaults>
</compile_context>

<pallas_src>
import jax
import jax.numpy as jnp
from jax.experimental import pallas as pl
from jax.experimental.pallas import tpu as pltpu

LANES = 128
MAX_TILE_ROWS = 8192            # (8192, 128) f32 tile = 4 MiB per buffer
VMEM_LIMIT_BYTES = 32 * 1024 * 1024
_SMALL_INPUT_ELEMS = 1024       # below ~one (8,128)-block of work -> pure-JAX path


def _round_up(x: int, m: int) -> int:
    return (x + m - 1) // m * m


def _cmp_dtype_for(dtype) -> jnp.dtype:
    """32-bit dtype used for the in-register comparison."""
    if jnp.issubdtype(dtype, jnp.floating):
        return jnp.float32
    return jnp.int32


def _dim_semantics(num_blocks: int):
    """Explicitly shard the row axis across v7x's two TensorCores."""
    try:
        kind = jax.devices()[0].device_kind.lower()
    except Exception:  # pragma: no cover - defensive only
        kind = ""
    if "v7" in kind and num_blocks >= 2:
        return (pltpu.CORE_PARALLEL,)
    # On single-TC chips (v5e/v6e) parallel vs arbitrary is codegen-neutral.
    return ("parallel",)


def _make_selective_kernel(n: int, cmp_dtype):
    def kernel(opts_ref, w_ref, x_ref, o_ref):
        # x_ref: (tile_rows, 128) block of option codes in their native dtype.
        x = x_ref[...].astype(cmp_dtype)            # in-register upcast (free-ish)
        # Fold option 0 into the accumulator init; unknown codes -> 0.0,
        # duplicate codes -> last match wins (module assumes exactly one).
        acc = jnp.where(x == opts_ref[0], w_ref[0], jnp.float32(0.0))
        for j in range(1, n):                       # n is tiny & static -> unrolled
            acc = jnp.where(x == opts_ref[j], w_ref[j], acc)
        o_ref[...] = acc.astype(o_ref.dtype)
    return kernel


def _selective_jax(flat, opts_cmp, w_f32, cmp_dtype, out_dtype):
    """Fused XLA path (tiny inputs / <128-element tails).

    Uses the exact same compare/select chain as the kernel so both paths agree
    element-for-element regardless of input size."""
    x = flat.astype(cmp_dtype)
    n = int(opts_cmp.shape[0])
    acc = jnp.where(x == opts_cmp[0], w_f32[0], jnp.float32(0.0))
    for j in range(1, n):
        acc = jnp.where(x == opts_cmp[j], w_f32[j], acc)
    return acc.astype(out_dtype)


def selective_forward(option, option_list, weights):
    """option: array of option codes (any shape); option_list: (n,); weights: (n,)."""
    orig_shape = option.shape
    n = int(option_list.shape[0])
    out_dtype = weights.dtype
    cmp_dtype = _cmp_dtype_for(option.dtype)

    # Only the n-element vectors are cast on the host (negligible); the big
    # tensor streams in its native dtype.
    opts_cmp = option_list.astype(cmp_dtype)
    w_f32 = weights.astype(jnp.float32)

    flat = option.reshape(-1)                       # free (metadata only)
    m = int(flat.shape[0])

    if m == 0:
        return jnp.zeros(orig_shape, out_dtype)
    if m < _SMALL_INPUT_ELEMS:
        return _selective_jax(flat, opts_cmp, w_f32, cmp_dtype, out_dtype).reshape(orig_shape)

    # Kernel runs on the 128-aligned prefix as a lane-dense (rows, 128) slab;
    # the <128-element tail (if any) goes through the JAX path.  No padding
    # pass over the input, no slice-copy of the output.
    m_aligned = (m // LANES) * LANES
    tail = m - m_aligned
    rows = m_aligned // LANES
    prefix = flat if tail == 0 else flat[:m_aligned]
    x2d = prefix.reshape(rows, LANES)

    tile_rows = min(MAX_TILE_ROWS, _round_up(rows, 8))
    num_blocks = pl.cdiv(rows, tile_rows)
    grid = (num_blocks,)

    bytes_accessed = m_aligned * option.dtype.itemsize + m_aligned * jnp.dtype(out_dtype).itemsize
    cost = pl.CostEstimate(flops=2 * n * m_aligned, transcendentals=0,
                           bytes_accessed=bytes_accessed)

    out2d = pl.pallas_call(
        _make_selective_kernel(n, cmp_dtype),
        out_shape=jax.ShapeDtypeStruct((rows, LANES), out_dtype),
        grid_spec=pltpu.PrefetchScalarGridSpec(
            num_scalar_prefetch=2,                  # option_list, weights -> SMEM
            grid=grid,
            in_specs=[
                pl.BlockSpec((tile_rows, LANES), lambda i, opts, w: (i, 0)),
            ],
            out_specs=pl.BlockSpec((tile_rows, LANES), lambda i, opts, w: (i, 0)),
        ),
        compiler_params=pltpu.CompilerParams(
            dimension_semantics=_dim_semantics(num_blocks),
            vmem_limit_bytes=VMEM_LIMIT_BYTES),
        cost_estimate=cost,
    )(opts_cmp, w_f32, x2d)

    out_flat = out2d.reshape(-1)
    if tail:
        out_tail = _selective_jax(flat[m_aligned:], opts_cmp, w_f32, cmp_dtype, out_dtype)
        out_flat = jnp.concatenate([out_flat, out_tail])
    return out_flat.reshape(orig_shape)


if __name__ == "__main__":
    key = jax.random.PRNGKey(0)

    # Module setup: option_list of length n, weights Parameter of shape (n,).
    option_list = jnp.array([5, 2, 9, 7], dtype=jnp.int32)   # n = 4, non-trivial codes
    n = int(option_list.shape[0])
    weights = 1.0 + 0.5 * jnp.arange(n, dtype=jnp.float32)   # distinct "trained" weights

    def reference(option):
        idx = jnp.argmax(option[..., None] == option_list, axis=-1)
        return weights[idx]

    k1, k2 = jax.random.split(key)

    # Test 1: (2, 4, 16, 16) = 2048 elements (128-aligned) -> pure kernel path.
    opt1 = option_list[jax.random.randint(k1, (2, 4, 16, 16), 0, n)]
    out1 = jax.block_until_ready(selective_forward(opt1, option_list, weights))
    assert out1.shape == opt1.shape and out1.dtype == weights.dtype
    assert jnp.allclose(out1, reference(opt1)), "mismatch vs reference (aligned case)"

    # Test 2: (5, 17, 13) = 1105 elements -> kernel on 1024-aligned prefix +
    # 81-element JAX tail, stitched with a single concatenate.
    opt2 = option_list[jax.random.randint(k2, (5, 17, 13), 0, n)]
    out2 = jax.block_until_ready(selective_forward(opt2, option_list, weights))
    assert out2.shape == opt2.shape and out2.dtype == weights.dtype
    assert jnp.allclose(out2, reference(opt2)), "mismatch vs reference (unaligned case)"

    print("KERNEL_OK")
</pallas_src>

<mosaic_0001>
module attributes {stable_mosaic.version = 11 : i64} {
  func.func @kernel(%arg0: i32, %arg1: memref<4xi32, #tpu.memory_space<smem>>, %arg2: memref<4xf32, #tpu.memory_space<smem>>, %arg3: memref<16x128xi32, #tpu.memory_space<vmem>>, %arg4: memref<16x128xf32, #tpu.memory_space<vmem>>) attributes {dimension_semantics = [#tpu.dimension_semantics<parallel>], iteration_bounds = array<i64: 1>, scalar_prefetch = 2 : i64, scratch_operands = 0 : i64, tpu.core_type = #tpu.core_type<tc>, window_params = [{transform_indices = @transform_0, window_bounds = array<i64: 16, 128>}, {transform_indices = @transform_1, window_bounds = array<i64: 16, 128>}]} {
    %c0 = arith.constant 0 : index
    %c0_0 = arith.constant 0 : index
    %0 = vector.load %arg3[%c0, %c0_0] : memref<16x128xi32, #tpu.memory_space<vmem>>, vector<16x128xi32>
    %c0_1 = arith.constant 0 : index
    %1 = memref.load %arg1[%c0_1] : memref<4xi32, #tpu.memory_space<smem>>
    %2 = vector.broadcast %1 : i32 to vector<16x128xi32>
    %3 = arith.cmpi eq, %0, %2 : vector<16x128xi32>
    %c0_2 = arith.constant 0 : index
    %4 = memref.load %arg2[%c0_2] : memref<4xf32, #tpu.memory_space<smem>>
    %cst = arith.constant 0.000000e+00 : f32
    %5 = vector.broadcast %4 : f32 to vector<16x128xf32>
    %6 = vector.broadcast %cst : f32 to vector<16x128xf32>
    %7 = arith.select %3, %5, %6 : vector<16x128xi1>, vector<16x128xf32>
    %c1 = arith.constant 1 : index
    %8 = memref.load %arg1[%c1] : memref<4xi32, #tpu.memory_space<smem>>
    %9 = vector.broadcast %8 : i32 to vector<16x128xi32>
    %10 = arith.cmpi eq, %0, %9 : vector<16x128xi32>
    %c1_3 = arith.constant 1 : index
    %11 = memref.load %arg2[%c1_3] : memref<4xf32, #tpu.memory_space<smem>>
    %12 = vector.broadcast %11 : f32 to vector<16x128xf32>
    %13 = arith.select %10, %12, %7 : vector<16x128xi1>, vector<16x128xf32>
    %c2 = arith.constant 2 : index
    %14 = memref.load %arg1[%c2] : memref<4xi32, #tpu.memory_space<smem>>
    %15 = vector.broadcast %14 : i32 to vector<16x128xi32>
    %16 = arith.cmpi eq, %0, %15 : vector<16x128xi32>
    %c2_4 = arith.constant 2 : index
    %17 = memref.load %arg2[%c2_4] : memref<4xf32, #tpu.memory_space<smem>>
    %18 = vector.broadcast %17 : f32 to vector<16x128xf32>
    %19 = arith.select %16, %18, %13 : vector<16x128xi1>, vector<16x128xf32>
    %c3 = arith.constant 3 : index
    %20 = memref.load %arg1[%c3] : memref<4xi32, #tpu.memory_space<smem>>
    %21 = vector.broadcast %20 : i32 to vector<16x128xi32>
    %22 = arith.cmpi eq, %0, %21 : vector<16x128xi32>
    %c3_5 = arith.constant 3 : index
    %23 = memref.load %arg2[%c3_5] : memref<4xf32, #tpu.memory_space<smem>>
    %24 = vector.broadcast %23 : f32 to vector<16x128xf32>
    %25 = arith.select %22, %24, %19 : vector<16x128xi1>, vector<16x128xf32>
    %c0_6 = arith.constant 0 : index
    %c0_7 = arith.constant 0 : index
    %26 = vector.load %arg4[%c0_6, %c0_7] : memref<16x128xf32, #tpu.memory_space<vmem>>, vector<16x128xf32>
    tpu.vector_store %arg4[%c0_6, %c0_7], %25 {strides = array<i32>} : memref<16x128xf32, #tpu.memory_space<vmem>>, vector<16x128xf32>,
    return
  }
  func.func @transform_0(%arg0: i32, %arg1: memref<4xi32, #tpu.memory_space<smem>>, %arg2: memref<4xf32, #tpu.memory_space<smem>>) -> (i32, i32) {
    %c0_i32 = arith.constant 0 : i32
    %c0_i32_0 = arith.constant 0 : i32
    return %arg0, %c0_i32 : i32, i32
  }
  func.func @transform_1(%arg0: i32, %arg1: memref<4xi32, #tpu.memory_space<smem>>, %arg2: memref<4xf32, #tpu.memory_space<smem>>) -> (i32, i32) {
    %c0_i32 = arith.constant 0 : i32
    %c0_i32_0 = arith.constant 0 : i32
    return %arg0, %c0_i32 : i32, i32
  }
}

</mosaic_0001>

<llo_original>
// kernel: tpu_custom_call.1
$region0: #{tpu_custom_call.1}
  #allocation0 [shape = 'u32[]', space=smem, size = 0x4, offset = 0x4, fixed_abs, tag = 'smem constant byte address 0x4 - core index']
  #allocation1 [shape = 'u32[144,128]{1,0:T(1,128)}', space=vmem, size = 0x12000, scoped, tag = 'internal scratch']
  #allocation2 [shape = 's32[1]{0}', space=sflag, size = 0x4, scoped, tag = 'scoped memory for tpu_custom_call.1']
  #allocation3 [shape = 'u8[512]{0}', space=smem, size = 0x200, scoped, tag = 'prefetched SMEM operand 0']
  #allocation4 [shape = 'u8[512]{0}', space=smem, size = 0x200, scoped, tag = 'prefetched SMEM operand 1']
  %s0 = inlined_call_operand.hbm [shape: s32[4], index: 0, kind: input, shape index: {}]
  %s1 = inlined_call_operand.vmem [shape: f32[4], index: 1, kind: input, shape index: {}]
  %s2 = inlined_call_operand.hbm [shape: s32[16,128], index: 2, kind: input, shape index: {}]
  %s3 = inlined_call_operand.hbm [shape: f32[16,128], index: 3, kind: output, shape index: {}]
  %s4 = sld [smem:[#allocation0]]
  $region18: #{tpu_custom_call.1} parent=0
    _
  %s6 = ssub.s32 1, %s4
  %s7 = scalar_select 0, %s6, %s4
  %9 = dma.hbm_to_smem %s0, 16, [#allocation3], [#allocation2]
  %s10 = sshll.u32 %s1, 4
  %s11 = int_to_ptr.vmem [resolvable:$true] %s10
  %13 = dma.vmem_to_smem %s11, 16, [#allocation4], [#allocation2]
  %14 = dma.done [#allocation2], 32
  %15 = sfence
  $region1: #{tpu_custom_call.1} parent=0
    #allocation5 [shape = 'u8[8192]{0}', space=vmem, size = 0x2000, scoped, tag = 'input window, operand 2, single buffered']
    #allocation6 [shape = 's32[1]{0}', space=sflag, size = 0x4, scoped, tag = 'scoped memory for tpu_custom_call.1']
    #allocation7 [shape = 's32[1]{0}', space=sflag, size = 0x4, scoped, tag = 'scoped memory for tpu_custom_call.1']
    #allocation8 [shape = 'u8[8192]{0}', space=vmem, size = 0x2000, scoped, tag = 'output window, operand 0, single buffered']
    %16 = vsyncpa [#allocation6], 0
    %17 = vsyncpa [#allocation7], 0
    // Predicated region
    $region2: #{tpu_custom_call.1} parent=1 // pred_check
      _
    $region3: #{tpu_custom_call.1} parent=1 // pred_check_branch
      %19 = sbr.rel (0) target = $region5
    $region4: #{tpu_custom_call.1} parent=1 // pred_region
      %s21 = ssub.s32 256, 256
      %22 = vsyncadd [#allocation6], %s21
      %s23 = sshll.u32 [#allocation5], 4
      %s24 = int_to_ptr.vmem [resolvable:$true] %s23
      %29 = dma.hbm_to_vmem [thread:$0]  %s2, 256, %s24, [#allocation6], 128, 128, 8
    $region5: #{tpu_custom_call.1} parent=1 // pred_fallthru
      _
    // Predicated region
    $region6: #{tpu_custom_call.1} parent=1 // pred_check
      _
    $region7: #{tpu_custom_call.1} parent=1 // pred_check_branch
      %31 = sbr.rel (0) target = $region9
    $region8: #{tpu_custom_call.1} parent=1 // pred_region
      %32 = dma.done [#allocation6], 256
    $region9: #{tpu_custom_call.1} parent=1 // pred_fallthru
      _
    %v33 = vld [vmem:[#allocation5] sm:$0xff]
    %v34 = vld [vmem:[#allocation5 + $0x8] sm:$0xff]
    %s35 = sld [smem:[#allocation3]]
    %v36 = vstv %s35
    %vm37 = vcmp.eq.s32.totalorder %v33, %v36
    %vm38 = vcmp.eq.s32.totalorder %v34, %v36
    %s39 = sld [smem:[#allocation4]]
    %v40 = vstv %s39
    %v41 = vsel %vm37, %v40, 0.0
    %v42 = vsel %vm38, %v40, 0.0
    %s43 = sld [smem:[#allocation3 + $0x1]]
    %v44 = vstv %s43
    %vm45 = vcmp.eq.s32.totalorder %v33, %v44
    %vm46 = vcmp.eq.s32.totalorder %v34, %v44
    %s47 = sld [smem:[#allocation4 + $0x1]]
    %v48 = vstv %s47
    %v49 = vsel %vm45, %v48, %v41
    %v50 = vsel %vm46, %v48, %v42
    %s51 = sld [smem:[#allocation3 + $0x2]]
    %v52 = vstv %s51
    %vm53 = vcmp.eq.s32.totalorder %v33, %v52
    %vm54 = vcmp.eq.s32.totalorder %v34, %v52
    %s55 = sld [smem:[#allocation4 + $0x2]]
    %v56 = vstv %s55
    %v57 = vsel %vm53, %v56, %v49
    %v58 = vsel %vm54, %v56, %v50
    %s59 = sld [smem:[#allocation3 + $0x3]]
    %v60 = vstv %s59
    %vm61 = vcmp.eq.s32.totalorder %v33, %v60
    %vm62 = vcmp.eq.s32.totalorder %v34, %v60
    %s63 = sld [smem:[#allocation4 + $0x3]]
    %v64 = vstv %s63
    %v65 = vsel %vm61, %v64, %v57
    %v66 = vsel %vm62, %v64, %v58
    %67 = vst [vmem:[#allocation8] sm:$0xff] %v65
    %68 = vst [vmem:[#allocation8 + $0x8] sm:$0xff] %v66
    // Predicated region
    $region10: #{tpu_custom_call.1} parent=1 // pred_check
      _
    $region11: #{tpu_custom_call.1} parent=1 // pred_check_branch
      %70 = sbr.rel (0) target = $region13
    $region12: #{tpu_custom_call.1} parent=1 // pred_region
      %s72 = ssub.s32 256, 256
      %73 = vsyncadd [#allocation7], %s72
      %s74 = sshll.u32 [#allocation8], 4
      %s75 = int_to_ptr.vmem [resolvable:$true] %s74
      %80 = dma.vmem_to_hbm [thread:$0]  %s75, 256, %s3, [#allocation7], 128, 128, 8
    $region13: #{tpu_custom_call.1} parent=1 // pred_fallthru
      _
    // Predicated region
    $region14: #{tpu_custom_call.1} parent=1 // pred_check
      _
    $region15: #{tpu_custom_call.1} parent=1 // pred_check_branch
      %82 = sbr.rel (0) target = $region17
    $region16: #{tpu_custom_call.1} parent=1 // pred_region
      %83 = dma.done [#allocation7], 256
    $region17: #{tpu_custom_call.1} parent=1 // pred_fallthru
      _
    %84 = vsyncpa [#allocation6], 1
    %85 = vsyncpa [#allocation7], 1

</llo_original>
